<compile_context>
chip_gen: v6e
topology: v6e:2x2x1
jax: 0.10.0
libtpu: 0.0.40
codegen_flags: <defaults>
</compile_context>

<pallas_src>
import functools
import numpy as np
import jax
import jax.numpy as jnp
from jax.experimental import pallas as pl
from jax.experimental.pallas import tpu as pltpu

_EPS = 1e-5


def _round_up(n, m):
    return ((n + m - 1) // m) * m


# ---------------------------------------------------------------------------
# One kernel body, three stages (split at the BatchNorm boundaries).
# ---------------------------------------------------------------------------
def down_stage_kernel(x_ref,
                      w1_ref, b1_ref,
                      w2_ref, b2_ref,
                      wp_ref, bp_ref,
                      w3_ref, b3_ref,
                      s1_ref, o1_ref,
                      s2_ref, o2_ref,
                      out_ref, *, stage, L):
    b, _, Lp = x_ref.shape
    col = jax.lax.broadcasted_iota(jnp.int32, (1, 1, Lp), 2)
    valid = None if Lp == L else (col < L).astype(jnp.float32)

    def mask(h):
        # keep padded columns exactly zero (also what BN-stat sums rely on)
        return h if valid is None else h * valid

    def silu(h):
        # single-EUP-op sigmoid: sigmoid(h) = 0.5*tanh(0.5*h) + 0.5
        return h * (0.5 * jnp.tanh(0.5 * h) + 0.5)

    def shift(h, d):
        # d=+1 -> h[..., j-1]; d=-1 -> h[..., j+1].  Operands have zero padded columns,
        # so the rolled-in column is exactly the conv's zero padding.
        if d > 0:
            s = pltpu.roll(h, 1, 2)
            if valid is None:                       # only when L is already 256-aligned
                s = jnp.where(col == 0, jnp.zeros_like(s), s)
        else:
            s = pltpu.roll(h, Lp - 1, 2)
            if valid is None:
                s = jnp.where(col == L - 1, jnp.zeros_like(s), s)
        return s

    def bmm(w2d, h_bf16):
        # (C_out, C) x (b, C, Lp) -> (b, C_out, Lp): bf16 MXU operands, f32 accumulate.
        wb = jnp.broadcast_to(w2d, (b,) + w2d.shape)
        return jnp.einsum("boc,bcl->bol", wb, h_bf16,
                          preferred_element_type=jnp.float32)

    def conv3(h, w_ref_, b_ref_):
        # Conv1d(k=3, pad=1): three accumulated taps (no concatenate copy).
        y = (bmm(w_ref_[1], h.astype(jnp.bfloat16))
             + bmm(w_ref_[0], shift(h, +1).astype(jnp.bfloat16))
             + bmm(w_ref_[2], shift(h, -1).astype(jnp.bfloat16)))
        return y + b_ref_[...]                      # (C_out, 1) broadcast bias

    def write_stats(h):
        # per-tile sum and within-tile-centered sum-of-squares; host combines tiles with
        # the law of total variance.
        n = float(b * L)
        s1 = jnp.sum(jnp.sum(h, axis=2, keepdims=True), axis=0, keepdims=True)
        mu = s1 * (1.0 / n)
        d = mask(h - mu)
        ss = jnp.sum(jnp.sum(d * d, axis=2, keepdims=True), axis=0, keepdims=True)
        out_ref[:, :, 0:1] = s1
        out_ref[:, :, 1:2] = ss

    x = x_ref[...]                                   # (b, C_in, Lp) f32, padded cols = 0
    h = mask(silu(conv3(x, w1_ref, b1_ref)))         # Conv1d(dim_in->dim_out) + SiLU
    if stage == 0:
        write_stats(h)
        return

    bn1 = mask(h * s1_ref[...] + o1_ref[...])        # BatchNorm1d (per-channel FMA)
    r = (conv3(bn1, w2_ref, b2_ref)                  # Conv1d(dim_out->dim_out)
         + bmm(wp_ref[...], x.astype(jnp.bfloat16)) + bp_ref[...])   # 1x1 projection
    u = mask(silu(r))                                # SiLU (Down tail)
    if stage == 1:
        write_stats(u)
        return

    bn2 = mask(u * s2_ref[...] + o2_ref[...])        # BatchNorm1d
    # TODO(synk): decimate in-kernel (even/odd phase via strided ref loads) so only L/2
    # columns hit HBM; for now the full-rate, lane-dense slab is stored and the host
    # takes [::2].
    out_ref[...] = conv3(bn2, w3_ref, b3_ref)        # final k3/p1 conv at full rate


# ---------------------------------------------------------------------------
# Host-side glue: sizing, BN stat combination, the three pallas_call stages.
# ---------------------------------------------------------------------------
def _vmem_capacity_bytes():
    try:
        cap = getattr(pltpu.get_tpu_info(), "vmem_capacity_bytes", None)
        if cap:
            return int(cap)
    except Exception:
        pass
    return 64 * 1024 * 1024          # conservative default (v7x per-core VMEM)


def _pick_b_tile(B, C_in, C_out, Lp, budget_bytes):
    best = 1
    for d in range(1, B + 1):
        if B % d:
            continue
        # x (double-buffered + bf16 copy) + out (double-buffered) + ~12 live f32 temps
        est = 4 * d * Lp * (3 * C_in + 14 * C_out) + (1 << 20)
        if est <= budget_bytes:
            best = d
    return best


def _bn_scale_offset(stats, gamma, beta, n_tile, n_total):
    """Combine per-tile (sum, centered-SS) into training-mode BN scale/offset."""
    s = stats[:, :, 0]                               # (T, C)
    ss = stats[:, :, 1]
    mean = jnp.sum(s, axis=0) / n_total
    mu_t = s / n_tile
    var = (jnp.sum(ss, axis=0)
           + n_tile * jnp.sum((mu_t - mean[None, :]) ** 2, axis=0)) / n_total
    var = jnp.maximum(var, 0.0)
    scale = gamma.reshape(-1) * jax.lax.rsqrt(var + _EPS)
    offset = beta.reshape(-1) - mean * scale
    return scale.reshape(-1, 1), offset.reshape(-1, 1)


def down_forward(x, params):
    """x: (B, C_in, L) float32 -> (B, C_out, L_out) float32 (PyTorch `Down` forward)."""
    B, C_in, L = x.shape
    C_out = params["w1"].shape[0]
    L_out = (L + 2 - 3) // 2 + 1
    Lp = _round_up(L, 256)             # lane-dense stores; Lp/2 also 128-aligned

    # only a last-dim zero pad (no transpose / reshape of x)
    xp = x if Lp == L else jnp.pad(x, ((0, 0), (0, 0), (0, Lp - L)))

    # weights: (C_out, C, 3) -> (3, C_out, C), bf16 MXU operands
    def prep_w(w):
        return jnp.transpose(w, (2, 0, 1)).astype(jnp.bfloat16)

    w1, w2, w3 = prep_w(params["w1"]), prep_w(params["w2"]), prep_w(params["w3"])
    wp = params["wp"][:, :, 0].astype(jnp.bfloat16)
    b1, b2, bp, b3 = params["b1"], params["b2"], params["bp"], params["b3"]

    cap = _vmem_capacity_bytes()
    vmem_limit = min(int(0.75 * cap), 100 * 1024 * 1024)   # ~48MiB on v7x, ~96MiB on v5e/v6e
    b_tile = _pick_b_tile(B, C_in, C_out, Lp, vmem_limit // 2)
    T = B // b_tile
    # TODO(synk): for very long L, also tile the length axis (needs 1-column halos).

    x_spec = pl.BlockSpec((b_tile, C_in, Lp), lambda i: (i, 0, 0))

    def full_spec(a):
        zeros_idx = (0,) * a.ndim
        return pl.BlockSpec(a.shape, lambda i: zeros_idx)

    ones = jnp.ones((C_out, 1), jnp.float32)
    zeros = jnp.zeros((C_out, 1), jnp.float32)

    def run_stage(stage, s1, o1, s2, o2, out_shape, out_spec, cost):
        args = (xp, w1, b1, w2, b2, wp, bp, w3, b3, s1, o1, s2, o2)
        return pl.pallas_call(
            functools.partial(down_stage_kernel, stage=stage, L=L),
            out_shape=out_shape,
            grid=(T,),
            in_specs=[x_spec] + [full_spec(a) for a in args[1:]],
            out_specs=out_spec,
            compiler_params=pltpu.CompilerParams(
                dimension_semantics=("parallel",),
                vmem_limit_bytes=vmem_limit),
            cost_estimate=cost,
        )(*args)

    stats_shape = jax.ShapeDtypeStruct((T, C_out, 2), jnp.float32)
    stats_spec = pl.BlockSpec((1, C_out, 2), lambda i: (i, 0, 0))

    flops1 = 2 * B * Lp * C_out * 3 * C_in
    flops2 = flops1 + 2 * B * Lp * C_out * (3 * C_out + C_in)
    flops3 = flops2 + 2 * B * Lp * C_out * 3 * C_out
    x_bytes = 4 * B * C_in * Lp

    def cost(flops, n_silu, out_bytes):
        return pl.CostEstimate(flops=flops,
                               transcendentals=n_silu * B * Lp * C_out,
                               bytes_accessed=x_bytes + out_bytes)

    n_tile = float(b_tile * L)
    n_total = float(B * L)

    # stage 0: stats of silu(conv1(x))  ->  BN1 scale/offset
    st0 = run_stage(0, ones, zeros, ones, zeros, stats_shape, stats_spec,
                    cost(flops1, 1, 8 * T * C_out))
    s1c, o1c = _bn_scale_offset(st0, params["g1"], params["be1"], n_tile, n_total)

    # stage 1: stats of silu(conv2(BN1(.)) + proj(x))  ->  BN2 scale/offset
    st1 = run_stage(1, s1c, o1c, ones, zeros, stats_shape, stats_spec,
                    cost(flops2, 2, 8 * T * C_out))
    s2c, o2c = _bn_scale_offset(st1, params["g2"], params["be2"], n_tile, n_total)

    # stage 2: final conv (full-rate, lane-dense slab); stride-2 + unpad on the host
    y = run_stage(2, s1c, o1c, s2c, o2c,
                  jax.ShapeDtypeStruct((B, C_out, Lp), jnp.float32),
                  pl.BlockSpec((b_tile, C_out, Lp), lambda i: (i, 0, 0)),
                  cost(flops3, 2, 4 * B * C_out * Lp))

    out = y[:, :, 0:L:2]
    assert out.shape == (B, C_out, L_out), out.shape
    return out


# ---------------------------------------------------------------------------
# Pure-JAX reference (NCL layout, lax.conv) for the correctness check.
# ---------------------------------------------------------------------------
def _ref_conv1d(x, w, b, stride=1, pad=1):
    y = jax.lax.conv_general_dilated(
        x, w, window_strides=(stride,), padding=[(pad, pad)],
        dimension_numbers=("NCH", "OIH", "NCH"))
    return y + b[None]


def _ref_bn(x, g, be):
    mean = jnp.mean(x, axis=(0, 2), keepdims=True)
    var = jnp.mean((x - mean) ** 2, axis=(0, 2), keepdims=True)
    return (x - mean) * jax.lax.rsqrt(var + _EPS) * g[None] + be[None]


def _ref_silu(x):
    return x * (1.0 / (1.0 + jnp.exp(-x)))


def down_reference(x, p):
    h = _ref_conv1d(x, p["w1"], p["b1"])
    h = _ref_silu(h)
    h = _ref_bn(h, p["g1"], p["be1"])
    h = _ref_conv1d(h, p["w2"], p["b2"])
    proj = _ref_conv1d(x, p["wp"], p["bp"], stride=1, pad=0)
    r = h + proj
    r = _ref_silu(r)
    r = _ref_bn(r, p["g2"], p["be2"])
    return _ref_conv1d(r, p["w3"], p["b3"], stride=2, pad=1)


# ---------------------------------------------------------------------------
if __name__ == "__main__":
    B, C_in, C_out, L = 2, 4, 8, 16   # dim_in=4, dim_out=8 (proj is a 1x1 conv)

    key = jax.random.PRNGKey(0)
    ks = jax.random.split(key, 12)

    params = {
        "w1": 0.1 * jax.random.normal(ks[0], (C_out, C_in, 3), jnp.float32),
        "b1": 0.1 * jax.random.normal(ks[1], (C_out, 1), jnp.float32),
        "g1": 1.0 + 0.1 * jax.random.normal(ks[2], (C_out, 1), jnp.float32),
        "be1": 0.1 * jax.random.normal(ks[3], (C_out, 1), jnp.float32),
        "w2": 0.1 * jax.random.normal(ks[4], (C_out, C_out, 3), jnp.float32),
        "b2": 0.1 * jax.random.normal(ks[5], (C_out, 1), jnp.float32),
        "wp": 0.1 * jax.random.normal(ks[6], (C_out, C_in, 1), jnp.float32),
        "bp": 0.1 * jax.random.normal(ks[7], (C_out, 1), jnp.float32),
        "g2": 1.0 + 0.1 * jax.random.normal(ks[8], (C_out, 1), jnp.float32),
        "be2": 0.1 * jax.random.normal(ks[9], (C_out, 1), jnp.float32),
        "w3": 0.1 * jax.random.normal(ks[10], (C_out, C_out, 3), jnp.float32),
        "b3": 0.1 * jax.random.normal(ks[11], (C_out, 1), jnp.float32),
    }

    x = jax.random.normal(jax.random.PRNGKey(42), (B, C_in, L), jnp.float32)

    out = jax.block_until_ready(down_forward(x, params))
    ref = jax.block_until_ready(down_reference(x, params))

    assert out.shape == (B, C_out, (L + 2 - 3) // 2 + 1), out.shape
    np.testing.assert_allclose(np.asarray(out), np.asarray(ref), rtol=5e-2, atol=5e-2)

    print("KERNEL_OK")
</pallas_src>

<mosaic_0001>
module attributes {stable_mosaic.version = 11 : i64} {
  func.func @down_stage_kernel(%arg0: i32, %arg1: memref<2x4x256xf32, #tpu.memory_space<vmem>>, %arg2: memref<3x8x4xbf16, #tpu.memory_space<vmem>>, %arg3: memref<8x1xf32, #tpu.memory_space<vmem>>, %arg4: memref<3x8x8xbf16, #tpu.memory_space<vmem>>, %arg5: memref<8x1xf32, #tpu.memory_space<vmem>>, %arg6: memref<8x4xbf16, #tpu.memory_space<vmem>>, %arg7: memref<8x1xf32, #tpu.memory_space<vmem>>, %arg8: memref<3x8x8xbf16, #tpu.memory_space<vmem>>, %arg9: memref<8x1xf32, #tpu.memory_space<vmem>>, %arg10: memref<8x1xf32, #tpu.memory_space<vmem>>, %arg11: memref<8x1xf32, #tpu.memory_space<vmem>>, %arg12: memref<8x1xf32, #tpu.memory_space<vmem>>, %arg13: memref<8x1xf32, #tpu.memory_space<vmem>>, %arg14: memref<1x8x2xf32, #tpu.memory_space<vmem>>) attributes {dimension_semantics = [#tpu.dimension_semantics<parallel>], iteration_bounds = array<i64: 1>, scalar_prefetch = 0 : i64, scratch_operands = 0 : i64, tpu.core_type = #tpu.core_type<tc>, window_params = [{transform_indices = @transform_0, window_bounds = array<i64: 2, 4, 256>}, {pipeline_mode = #tpu.pipeline_mode<synchronous>, transform_indices = @transform_1, window_bounds = array<i64: 3, 8, 4>}, {pipeline_mode = #tpu.pipeline_mode<synchronous>, transform_indices = @transform_2, window_bounds = array<i64: 8, 1>}, {pipeline_mode = #tpu.pipeline_mode<synchronous>, transform_indices = @transform_3, window_bounds = array<i64: 3, 8, 8>}, {pipeline_mode = #tpu.pipeline_mode<synchronous>, transform_indices = @transform_4, window_bounds = array<i64: 8, 1>}, {pipeline_mode = #tpu.pipeline_mode<synchronous>, transform_indices = @transform_5, window_bounds = array<i64: 8, 4>}, {pipeline_mode = #tpu.pipeline_mode<synchronous>, transform_indices = @transform_6, window_bounds = array<i64: 8, 1>}, {pipeline_mode = #tpu.pipeline_mode<synchronous>, transform_indices = @transform_7, window_bounds = array<i64: 3, 8, 8>}, {pipeline_mode = #tpu.pipeline_mode<synchronous>, transform_indices = @transform_8, window_bounds = array<i64: 8, 1>}, {pipeline_mode = #tpu.pipeline_mode<synchronous>, transform_indices = @transform_9, window_bounds = array<i64: 8, 1>}, {pipeline_mode = #tpu.pipeline_mode<synchronous>, transform_indices = @transform_10, window_bounds = array<i64: 8, 1>}, {pipeline_mode = #tpu.pipeline_mode<synchronous>, transform_indices = @transform_11, window_bounds = array<i64: 8, 1>}, {pipeline_mode = #tpu.pipeline_mode<synchronous>, transform_indices = @transform_12, window_bounds = array<i64: 8, 1>}, {transform_indices = @transform_13, window_bounds = array<i64: 1, 8, 2>}]} {
    %0 = tpu.iota {dimensions = array<i32: 2>} : vector<1x1x256xi32>
    %c16_i32 = arith.constant 16 : i32
    %1 = vector.broadcast %c16_i32 : i32 to vector<1x1x256xi32>
    %2 = arith.cmpi slt, %0, %1 : vector<1x1x256xi32>
    %3 = arith.extui %2 : vector<1x1x256xi1> to vector<1x1x256xi32>
    %4 = arith.sitofp %3 : vector<1x1x256xi32> to vector<1x1x256xf32>
    %c0 = arith.constant 0 : index
    %c0_0 = arith.constant 0 : index
    %c0_1 = arith.constant 0 : index
    %5 = vector.load %arg1[%c0, %c0_0, %c0_1] : memref<2x4x256xf32, #tpu.memory_space<vmem>>, vector<2x4x256xf32>
    %c1 = arith.constant 1 : index
    %c0_2 = arith.constant 0 : index
    %c0_3 = arith.constant 0 : index
    %6 = vector.load %arg2[%c1, %c0_2, %c0_3] : memref<3x8x4xbf16, #tpu.memory_space<vmem>>, vector<1x8x4xbf16>
    %7 = vector.shape_cast %6 : vector<1x8x4xbf16> to vector<8x4xbf16>
    %8 = arith.truncf %5 : vector<2x4x256xf32> to vector<2x4x256xbf16>
    %9 = vector.shape_cast %7 : vector<8x4xbf16> to vector<1x8x4xbf16>
    %10 = vector.broadcast %9 : vector<1x8x4xbf16> to vector<2x8x4xbf16>
    "tpu.trace_start"() <{level = 10 : i32, message = "boc,bcl->bol"}> : () -> ()
    %cst = arith.constant dense<0.000000e+00> : vector<2x8x256xf32>
    %11 = tpu.matmul %10, %8, %cst {dimension_numbers = #tpu.dot_dimension_numbers<[2], [1], [1], [2], [0, 0, 0, 1, 1, 2], [0], [0]>} : vector<2x8x4xbf16>, vector<2x4x256xbf16>, vector<2x8x256xf32> -> vector<2x8x256xf32>
    "tpu.trace_stop"() : () -> ()
    %c0_4 = arith.constant 0 : index
    %c0_5 = arith.constant 0 : index
    %c0_6 = arith.constant 0 : index
    %12 = vector.load %arg2[%c0_4, %c0_5, %c0_6] : memref<3x8x4xbf16, #tpu.memory_space<vmem>>, vector<1x8x4xbf16>
    %13 = vector.shape_cast %12 : vector<1x8x4xbf16> to vector<8x4xbf16>
    %c1_i32 = arith.constant 1 : i32
    %14 = tpu.dynamic_rotate %5 by %c1_i32 dim 2 : vector<2x4x256xf32>, i32 -> vector<2x4x256xf32>
    %15 = arith.truncf %14 : vector<2x4x256xf32> to vector<2x4x256xbf16>
    %16 = vector.shape_cast %13 : vector<8x4xbf16> to vector<1x8x4xbf16>
    %17 = vector.broadcast %16 : vector<1x8x4xbf16> to vector<2x8x4xbf16>
    "tpu.trace_start"() <{level = 10 : i32, message = "boc,bcl->bol"}> : () -> ()
    %cst_7 = arith.constant dense<0.000000e+00> : vector<2x8x256xf32>
    %18 = tpu.matmul %17, %15, %cst_7 {dimension_numbers = #tpu.dot_dimension_numbers<[2], [1], [1], [2], [0, 0, 0, 1, 1, 2], [0], [0]>} : vector<2x8x4xbf16>, vector<2x4x256xbf16>, vector<2x8x256xf32> -> vector<2x8x256xf32>
    "tpu.trace_stop"() : () -> ()
    %19 = arith.addf %11, %18 : vector<2x8x256xf32>
    %c2 = arith.constant 2 : index
    %c0_8 = arith.constant 0 : index
    %c0_9 = arith.constant 0 : index
    %20 = vector.load %arg2[%c2, %c0_8, %c0_9] : memref<3x8x4xbf16, #tpu.memory_space<vmem>>, vector<1x8x4xbf16>
    %21 = vector.shape_cast %20 : vector<1x8x4xbf16> to vector<8x4xbf16>
    %c255_i32 = arith.constant 255 : i32
    %22 = tpu.dynamic_rotate %5 by %c255_i32 dim 2 : vector<2x4x256xf32>, i32 -> vector<2x4x256xf32>
    %23 = arith.truncf %22 : vector<2x4x256xf32> to vector<2x4x256xbf16>
    %24 = vector.shape_cast %21 : vector<8x4xbf16> to vector<1x8x4xbf16>
    %25 = vector.broadcast %24 : vector<1x8x4xbf16> to vector<2x8x4xbf16>
    "tpu.trace_start"() <{level = 10 : i32, message = "boc,bcl->bol"}> : () -> ()
    %cst_10 = arith.constant dense<0.000000e+00> : vector<2x8x256xf32>
    %26 = tpu.matmul %25, %23, %cst_10 {dimension_numbers = #tpu.dot_dimension_numbers<[2], [1], [1], [2], [0, 0, 0, 1, 1, 2], [0], [0]>} : vector<2x8x4xbf16>, vector<2x4x256xbf16>, vector<2x8x256xf32> -> vector<2x8x256xf32>
    "tpu.trace_stop"() : () -> ()
    %27 = arith.addf %19, %26 : vector<2x8x256xf32>
    %c0_11 = arith.constant 0 : index
    %c0_12 = arith.constant 0 : index
    %28 = vector.load %arg3[%c0_11, %c0_12] : memref<8x1xf32, #tpu.memory_space<vmem>>, vector<8x1xf32>
    %29 = vector.shape_cast %28 : vector<8x1xf32> to vector<1x8x1xf32>
    %30 = vector.broadcast %29 : vector<1x8x1xf32> to vector<2x8x256xf32>
    %31 = arith.addf %27, %30 : vector<2x8x256xf32>
    %cst_13 = arith.constant 5.000000e-01 : f32
    %32 = vector.broadcast %cst_13 : f32 to vector<2x8x256xf32>
    %33 = arith.mulf %32, %31 : vector<2x8x256xf32>
    %34 = math.tanh %33 : vector<2x8x256xf32>
    %cst_14 = arith.constant 5.000000e-01 : f32
    %35 = vector.broadcast %cst_14 : f32 to vector<2x8x256xf32>
    %36 = arith.mulf %35, %34 : vector<2x8x256xf32>
    %cst_15 = arith.constant 5.000000e-01 : f32
    %37 = vector.broadcast %cst_15 : f32 to vector<2x8x256xf32>
    %38 = arith.addf %36, %37 : vector<2x8x256xf32>
    %39 = arith.mulf %31, %38 : vector<2x8x256xf32>
    %40 = vector.broadcast %4 : vector<1x1x256xf32> to vector<2x8x256xf32>
    %41 = arith.mulf %39, %40 : vector<2x8x256xf32>
    %cst_16 = arith.constant dense<0.000000e+00> : vector<2x8xf32>
    %42 = vector.multi_reduction <add>, %41, %cst_16 [2] : vector<2x8x256xf32> to vector<2x8xf32>
    %43 = vector.shape_cast %42 : vector<2x8xf32> to vector<2x8x1xf32>
    %cst_17 = arith.constant dense<0.000000e+00> : vector<8x1xf32>
    %44 = vector.multi_reduction <add>, %43, %cst_17 [0] : vector<2x8x1xf32> to vector<8x1xf32>
    %45 = vector.shape_cast %44 : vector<8x1xf32> to vector<1x8x1xf32>
    %cst_18 = arith.constant 3.125000e-02 : f32
    %46 = vector.broadcast %cst_18 : f32 to vector<1x8x1xf32>
    %47 = arith.mulf %45, %46 : vector<1x8x1xf32>
    %48 = vector.broadcast %47 : vector<1x8x1xf32> to vector<2x8x256xf32>
    %49 = arith.subf %41, %48 : vector<2x8x256xf32>
    %50 = vector.broadcast %4 : vector<1x1x256xf32> to vector<2x8x256xf32>
    %51 = arith.mulf %49, %50 : vector<2x8x256xf32>
    %52 = arith.mulf %51, %51 : vector<2x8x256xf32>
    %cst_19 = arith.constant dense<0.000000e+00> : vector<2x8xf32>
    %53 = vector.multi_reduction <add>, %52, %cst_19 [2] : vector<2x8x256xf32> to vector<2x8xf32>
    %54 = vector.shape_cast %53 : vector<2x8xf32> to vector<2x8x1xf32>
    %cst_20 = arith.constant dense<0.000000e+00> : vector<8x1xf32>
    %55 = vector.multi_reduction <add>, %54, %cst_20 [0] : vector<2x8x1xf32> to vector<8x1xf32>
    %56 = vector.shape_cast %55 : vector<8x1xf32> to vector<1x8x1xf32>
    %c0_21 = arith.constant 0 : index
    %c0_22 = arith.constant 0 : index
    %c0_23 = arith.constant 0 : index
    %57 = vector.load %arg14[%c0_21, %c0_22, %c0_23] : memref<1x8x2xf32, #tpu.memory_space<vmem>>, vector<1x8x1xf32>
    tpu.vector_store %arg14[%c0_21, %c0_22, %c0_23], %45 {strides = array<i32>} : memref<1x8x2xf32, #tpu.memory_space<vmem>>, vector<1x8x1xf32>,
    %c0_24 = arith.constant 0 : index
    %c0_25 = arith.constant 0 : index
    %c1_26 = arith.constant 1 : index
    %58 = vector.load %arg14[%c0_24, %c0_25, %c1_26] : memref<1x8x2xf32, #tpu.memory_space<vmem>>, vector<1x8x1xf32>
    tpu.vector_store %arg14[%c0_24, %c0_25, %c1_26], %56 {strides = array<i32>} : memref<1x8x2xf32, #tpu.memory_space<vmem>>, vector<1x8x1xf32>,
    return
  }
  func.func @transform_0(%arg0: i32) -> (i32, i32, i32) {
    %c0_i32 = arith.constant 0 : i32
    %c0_i32_0 = arith.constant 0 : i32
    %c0_i32_1 = arith.constant 0 : i32
    return %arg0, %c0_i32, %c0_i32_0 : i32, i32, i32
  }
  func.func @transform_1(%arg0: i32) -> (i32, i32, i32) {
    %c0_i32 = arith.constant 0 : i32
    %c0_i32_0 = arith.constant 0 : i32
    %c0_i32_1 = arith.constant 0 : i32
    %c0_i32_2 = arith.constant 0 : i32
    return %c0_i32, %c0_i32_0, %c0_i32_1 : i32, i32, i32
  }
  func.func @transform_2(%arg0: i32) -> (i32, i32) {
    %c0_i32 = arith.constant 0 : i32
    %c0_i32_0 = arith.constant 0 : i32
    %c0_i32_1 = arith.constant 0 : i32
    return %c0_i32, %c0_i32_0 : i32, i32
  }
  func.func @transform_3(%arg0: i32) -> (i32, i32, i32) {
    %c0_i32 = arith.constant 0 : i32
    %c0_i32_0 = arith.constant 0 : i32
    %c0_i32_1 = arith.constant 0 : i32
    %c0_i32_2 = arith.constant 0 : i32
    return %c0_i32, %c0_i32_0, %c0_i32_1 : i32, i32, i32
  }
  func.func @transform_4(%arg0: i32) -> (i32, i32) {
    %c0_i32 = arith.constant 0 : i32
    %c0_i32_0 = arith.constant 0 : i32
    %c0_i32_1 = arith.constant 0 : i32
    return %c0_i32, %c0_i32_0 : i32, i32
  }
  func.func @transform_5(%arg0: i32) -> (i32, i32) {
    %c0_i32 = arith.constant 0 : i32
    %c0_i32_0 = arith.constant 0 : i32
    %c0_i32_1 = arith.constant 0 : i32
    return %c0_i32, %c0_i32_0 : i32, i32
  }
  func.func @transform_6(%arg0: i32) -> (i32, i32) {
    %c0_i32 = arith.constant 0 : i32
    %c0_i32_0 = arith.constant 0 : i32
    %c0_i32_1 = arith.constant 0 : i32
    return %c0_i32, %c0_i32_0 : i32, i32
  }
  func.func @transform_7(%arg0: i32) -> (i32, i32, i32) {
    %c0_i32 = arith.constant 0 : i32
    %c0_i32_0 = arith.constant 0 : i32
    %c0_i32_1 = arith.constant 0 : i32
    %c0_i32_2 = arith.constant 0 : i32
    return %c0_i32, %c0_i32_0, %c0_i32_1 : i32, i32, i32
  }
  func.func @transform_8(%arg0: i32) -> (i32, i32) {
    %c0_i32 = arith.constant 0 : i32
    %c0_i32_0 = arith.constant 0 : i32
    %c0_i32_1 = arith.constant 0 : i32
    return %c0_i32, %c0_i32_0 : i32, i32
  }
  func.func @transform_9(%arg0: i32) -> (i32, i32) {
    %c0_i32 = arith.constant 0 : i32
    %c0_i32_0 = arith.constant 0 : i32
    %c0_i32_1 = arith.constant 0 : i32
    return %c0_i32, %c0_i32_0 : i32, i32
  }
  func.func @transform_10(%arg0: i32) -> (i32, i32) {
    %c0_i32 = arith.constant 0 : i32
    %c0_i32_0 = arith.constant 0 : i32
    %c0_i32_1 = arith.constant 0 : i32
    return %c0_i32, %c0_i32_0 : i32, i32
  }
  func.func @transform_11(%arg0: i32) -> (i32, i32) {
    %c0_i32 = arith.constant 0 : i32
    %c0_i32_0 = arith.constant 0 : i32
    %c0_i32_1 = arith.constant 0 : i32
    return %c0_i32, %c0_i32_0 : i32, i32
  }
  func.func @transform_12(%arg0: i32) -> (i32, i32) {
    %c0_i32 = arith.constant 0 : i32
    %c0_i32_0 = arith.constant 0 : i32
    %c0_i32_1 = arith.constant 0 : i32
    return %c0_i32, %c0_i32_0 : i32, i32
  }
  func.func @transform_13(%arg0: i32) -> (i32, i32, i32) {
    %c0_i32 = arith.constant 0 : i32
    %c0_i32_0 = arith.constant 0 : i32
    %c0_i32_1 = arith.constant 0 : i32
    return %arg0, %c0_i32, %c0_i32_0 : i32, i32, i32
  }
}

</mosaic_0001>

<llo_original>
// kernel: tpu_custom_call.1
$region0: #{tpu_custom_call.1}
  #allocation0 [shape = 'u32[]', space=smem, size = 0x4, offset = 0x4, fixed_abs, tag = 'smem constant byte address 0x4 - core index']
  #allocation1 [shape = 'u32[144,128]{1,0:T(1,128)}', space=vmem, size = 0x12000, scoped, tag = 'internal scratch']
  %s0 = inlined_call_operand.vmem [shape: f32[2,4,256], index: 0, kind: input, shape index: {}]
  %s1 = inlined_call_operand.vmem [shape: bf16[3,8,4], index: 1, kind: input, shape index: {}]
  %s2 = inlined_call_operand.vmem [shape: f32[8,1], index: 2, kind: input, shape index: {}]
  %s3 = inlined_call_operand.vmem [shape: bf16[3,8,8], index: 3, kind: input, shape index: {}]
  %s4 = inlined_call_operand.vmem [shape: f32[8,1], index: 4, kind: input, shape index: {}]
  %s5 = inlined_call_operand.vmem [shape: bf16[8,4], index: 5, kind: input, shape index: {}]
  %s6 = inlined_call_operand.vmem [shape: f32[8,1], index: 6, kind: input, shape index: {}]
  %s7 = inlined_call_operand.vmem [shape: bf16[3,8,8], index: 7, kind: input, shape index: {}]
  %s8 = inlined_call_operand.vmem [shape: f32[8,1], index: 8, kind: input, shape index: {}]
  %s9 = inlined_call_operand.vmem [shape: f32[8,1], index: 9, kind: input, shape index: {}]
  %s10 = inlined_call_operand.vmem [shape: f32[8,1], index: 10, kind: input, shape index: {}]
  %s11 = inlined_call_operand.vmem [shape: f32[8,1], index: 11, kind: input, shape index: {}]
  %s12 = inlined_call_operand.vmem [shape: f32[8,1], index: 12, kind: input, shape index: {}]
  %s13 = inlined_call_operand.vmem [shape: f32[1,8,2], index: 13, kind: output, shape index: {}]
  %s14 = sld [smem:[#allocation0]]
  $region62: #{tpu_custom_call.1} parent=0
    _
  %s16 = ssub.s32 1, %s14
  %s17 = scalar_select 0, %s16, %s14
  // Predicated region
  $region2: #{tpu_custom_call.1} parent=0 // pred_check
    _
  $region3: #{tpu_custom_call.1} parent=0 // pred_check_branch
    %19 = sbr.rel (0) target = $region5
  $region4: #{tpu_custom_call.1} parent=0 // pred_region
    _
  $region5: #{tpu_custom_call.1} parent=0 // pred_fallthru
    _
  // Predicated region
  $region6: #{tpu_custom_call.1} parent=0 // pred_check
    _
  $region7: #{tpu_custom_call.1} parent=0 // pred_check_branch
    %21 = sbr.rel (0) target = $region9
  $region8: #{tpu_custom_call.1} parent=0 // pred_region
    _
  $region9: #{tpu_custom_call.1} parent=0 // pred_fallthru
    _
  // Predicated region
  $region10: #{tpu_custom_call.1} parent=0 // pred_check
    _
  $region11: #{tpu_custom_call.1} parent=0 // pred_check_branch
    %23 = sbr.rel (0) target = $region13
  $region12: #{tpu_custom_call.1} parent=0 // pred_region
    _
  $region13: #{tpu_custom_call.1} parent=0 // pred_fallthru
    _
  // Predicated region
  $region14: #{tpu_custom_call.1} parent=0 // pred_check
    _
  $region15: #{tpu_custom_call.1} parent=0 // pred_check_branch
    %25 = sbr.rel (0) target = $region17
  $region16: #{tpu_custom_call.1} parent=0 // pred_region
    _
  $region17: #{tpu_custom_call.1} parent=0 // pred_fallthru
    _
  // Predicated region
  $region18: #{tpu_custom_call.1} parent=0 // pred_check
    _
  $region19: #{tpu_custom_call.1} parent=0 // pred_check_branch
    %27 = sbr.rel (0) target = $region21
  $region20: #{tpu_custom_call.1} parent=0 // pred_region
    _
  $region21: #{tpu_custom_call.1} parent=0 // pred_fallthru
    _
  // Predicated region
  $region22: #{tpu_custom_call.1} parent=0 // pred_check
    _
  $region23: #{tpu_custom_call.1} parent=0 // pred_check_branch
    %29 = sbr.rel (0) target = $region25
  $region24: #{tpu_custom_call.1} parent=0 // pred_region
    _
  $region25: #{tpu_custom_call.1} parent=0 // pred_fallthru
    _
  // Predicated region
  $region26: #{tpu_custom_call.1} parent=0 // pred_check
    _
  $region27: #{tpu_custom_call.1} parent=0 // pred_check_branch
    %31 = sbr.rel (0) target = $region29
  $region28: #{tpu_custom_call.1} parent=0 // pred_region
    _
  $region29: #{tpu_custom_call.1} parent=0 // pred_fallthru
    _
  // Predicated region
  $region30: #{tpu_custom_call.1} parent=0 // pred_check
    _
  $region31: #{tpu_custom_call.1} parent=0 // pred_check_branch
    %33 = sbr.rel (0) target = $region33
  $region32: #{tpu_custom_call.1} parent=0 // pred_region
    _
  $region33: #{tpu_custom_call.1} parent=0 // pred_fallthru
    _
  // Predicated region
  $region34: #{tpu_custom_call.1} parent=0 // pred_check
    _
  $region35: #{tpu_custom_call.1} parent=0 // pred_check_branch
    %35 = sbr.rel (0) target = $region37
  $region36: #{tpu_custom_call.1} parent=0 // pred_region
    _
  $region37: #{tpu_custom_call.1} parent=0 // pred_fallthru
    _
  // Predicated region
  $region38: #{tpu_custom_call.1} parent=0 // pred_check
    _
  $region39: #{tpu_custom_call.1} parent=0 // pred_check_branch
    %37 = sbr.rel (0) target = $region41
  $region40: #{tpu_custom_call.1} parent=0 // pred_region
    _
  $region41: #{tpu_custom_call.1} parent=0 // pred_fallthru
    _
  // Predicated region
  $region42: #{tpu_custom_call.1} parent=0 // pred_check
    _
  $region43: #{tpu_custom_call.1} parent=0 // pred_check_branch
    %39 = sbr.rel (0) target = $region45
  $region44: #{tpu_custom_call.1} parent=0 // pred_region
    _
  $region45: #{tpu_custom_call.1} parent=0 // pred_fallthru
    _
  // Predicated region
  $region46: #{tpu_custom_call.1} parent=0 // pred_check
    _
  $region47: #{tpu_custom_call.1} parent=0 // pred_check_branch
    %41 = sbr.rel (0) target = $region49
  $region48: #{tpu_custom_call.1} parent=0 // pred_region
    _
  $region49: #{tpu_custom_call.1} parent=0 // pred_fallthru
    _
  // Predicated region
  $region50: #{tpu_custom_call.1} parent=0 // pred_check
    _
  $region51: #{tpu_custom_call.1} parent=0 // pred_check_branch
    %43 = sbr.rel (0) target = $region53
  $region52: #{tpu_custom_call.1} parent=0 // pred_region
    _
  $region53: #{tpu_custom_call.1} parent=0 // pred_fallthru
    _
  %v45 = vlaneseq
  %v46 = vand.u32 %v45, 127
  %v47 = vadd.s32 %v46, 128
  %vm48 = vcmp.lt.s32.totalorder %v46, 16
  %vm49 = vcmp.lt.s32.totalorder %v47, 16
  %v50 = vsel %vm48, 1, 0
  %v51 = vsel %vm49, 1, 0
  %v52 = vcvt.s32.f32 %v50
  %v53 = vcvt.s32.f32 %v51
  %v54 = vld [vmem:[%s0] sm:$0xff]
  %v55 = vld [vmem:[%s0 + $0x8] sm:$0xff]
  %s56 = scalar_lea.vmem %s1, 4
  %v57 = vld [vmem:[%s56] sm:$0xf]
  %v60 = vcombine.high %v54, %v54
  %v61 = vcombine.high %v55, %v55
  %v64 = vpack.c.bf16 %v54, %v54
  %v65 = vpack.c.bf16 %v60, %v60
  %v66 = vpack.c.bf16 %v55, %v55
  %v67 = vpack.c.bf16 %v61, %v61
  %v68 = vld [vmem:[%s1] sm:$0xf]
  %69 = vrot.lane.b32.xlu0 %v54, 1
  %v70 = vpop.permute.xlu0 %69
  %71 = vrot.lane.b32.xlu0 %v55, 1
  %v72 = vpop.permute.xlu0 %71
  %73 = vrot.lane.b32.xlu0 %v60, 1
  %v74 = vpop.permute.xlu0 %73
  %75 = vrot.lane.b32.xlu0 %v61, 1
  %v76 = vpop.permute.xlu0 %75
  %vm77 = vcmp.lt.s32.totalorder %v46, 1
  %v78 = vsel %vm77, %v70, %v74
  %v79 = vsel %vm77, %v72, %v76
  %v80 = vsel %vm77, %v74, %v70
  %v81 = vsel %vm77, %v76, %v72
  %v82 = vpack.c.bf16 %v80, %v80
  %v83 = vpack.c.bf16 %v78, %v78
  %v84 = vpack.c.bf16 %v81, %v81
  %v85 = vpack.c.bf16 %v79, %v79
  %vm86 = vcmask 31744
  %v88 = vsel %vm86, %v68, 0
  %vm90 = vcmask 1041408
  %v92 = vsel %vm90, %v82, 0
  %v95 = vsel %vm90, %v83, 0
  %97 = vmatprep.subr.bf16.mxu0 0
  %98 = vmatpush1.bf16.msra.mxu0 0
  %99 = vmatprep.subr.bf16.mxu0 0
  %100 = vmatpush1.bf16.msra.mxu0 0
  %101 = vmatprep.subr.bf16.mxu0 0
  %102 = vmatpush1.bf16.msra.mxu0 0
  %103 = vmatprep.subr.bf16.mxu0 0
  %104 = vmatpush1.bf16.msra.mxu0 0
  %105 = vmatprep.subr.bf16.mxu0 0
  %106 = vmatpush1.bf16.msra.mxu0 0
  %107 = vmatprep.subr.bf16.mxu0 0
  %108 = vmatpush1.bf16.msra.mxu0 0
  %109 = vmatprep.subr.bf16.mxu0 0
  %110 = vmatpush1.bf16.msra.mxu0 0
  %111 = vmatprep.subr.bf16.mxu0 %v95
  %112 = vmatpush1.bf16.msra.mxu0 %v92
  %113 = vmatprep.subr.bf16.mxu0 0
  %114 = vmatpush2.bf16.msra.mxu0 0
  %115 = vmatprep.subr.bf16.mxu0 0
  %116 = vmatpush2.bf16.msra.mxu0 0
  %117 = vmatprep.subr.bf16.mxu0 0
  %118 = vmatpush2.bf16.msra.mxu0 0
  %119 = vmatprep.subr.bf16.mxu0 0
  %120 = vmatpush2.bf16.msra.mxu0 0
  %121 = vmatprep.subr.bf16.mxu0 0
  %122 = vmatpush2.bf16.msra.mxu0 0
  %123 = vmatprep.subr.bf16.mxu0 0
  %124 = vmatpush2.bf16.msra.mxu0 0
  %125 = vmatprep.subr.bf16.mxu0 0
  %126 = vmatpush2.bf16.msra.mxu0 0
  %127 = vmatprep.subr.bf16.mxu0 0
  %128 = vmatpush2.bf16.msra.mxu0 0
  %129 = vmatprep.mubr.bf16.mxu0 0
  %130 = vmatmul.mubr.bf16.gmra.mxu0 %v88
  %v131 = vpop.f32.mrf.mxu0
  %v132 = vadd.f32 0.0, %v131
  %v133 = vpop.f32.mrf.mxu0
  %v134 = vadd.f32 0.0, %v133
  %v135 = vpop.f32.mrf.mxu0
  %v136 = vpop.f32.mrf.mxu0
  %137 = vdwg.mxu0
  %v139 = vsel %vm90, %v84, 0
  %v142 = vsel %vm90, %v85, 0
  %144 = vmatprep.subr.bf16.mxu0 0
  %145 = vmatpush1.bf16.msra.mxu0 0
  %146 = vmatprep.subr.bf16.mxu0 0
  %147 = vmatpush1.bf16.msra.mxu0 0
  %148 = vmatprep.subr.bf16.mxu0 0
  %149 = vmatpush1.bf16.msra.mxu0 0
  %150 = vmatprep.subr.bf16.mxu0 0
  %151 = vmatpush1.bf16.msra.mxu0 0
  %152 = vmatprep.subr.bf16.mxu0 0
  %153 = vmatpush1.bf16.msra.mxu0 0
  %154 = vmatprep.subr.bf16.mxu0 0
  %155 = vmatpush1.bf16.msra.mxu0 0
  %156 = vmatprep.subr.bf16.mxu0 0
  %157 = vmatpush1.bf16.msra.mxu0 0
  %158 = vmatprep.subr.bf16.mxu0 %v142
  %159 = vmatpush1.bf16.msra.mxu0 %v139
  %160 = vmatprep.subr.bf16.mxu0 0
  %161 = vmatpush2.bf16.msra.mxu0 0
  %162 = vmatprep.subr.bf16.mxu0 0
  %163 = vmatpush2.bf16.msra.mxu0 0
  %164 = vmatprep.subr.bf16.mxu0 0
  %165 = vmatpush2.bf16.msra.mxu0 0
  %166 = vmatprep.subr.bf16.mxu0 0
  %167 = vmatpush2.bf16.msra.mxu0 0
  %168 = vmatprep.subr.bf16.mxu0 0
  %169 = vmatpush2.bf16.msra.mxu0 0
  %170 = vmatprep.subr.bf16.mxu0 0
  %171 = vmatpush2.bf16.msra.mxu0 0
  %172 = vmatprep.subr.bf16.mxu0 0
  %173 = vmatpush2.bf16.msra.mxu0 0
  %174 = vmatprep.subr.bf16.mxu0 0
  %175 = vmatpush2.bf16.msra.mxu0 0
  %176 = vmatprep.mubr.bf16.mxu0 0
  %177 = vmatmul.mubr.bf16.gmra.mxu0 %v88
  %v178 = vpop.f32.mrf.mxu0
  %v179 = vadd.f32 0.0, %v178
  %v180 = vpop.f32.mrf.mxu0
  %v181 = vadd.f32 0.0, %v180
  %v182 = vpop.f32.mrf.mxu0
  %v183 = vpop.f32.mrf.mxu0
  %184 = vdwg.mxu0
  %v186 = vsel %vm86, %v57, 0
  %v189 = vsel %vm90, %v64, 0
  %v192 = vsel %vm90, %v65, 0
  %194 = vmatprep.subr.bf16.mxu0 0
  %195 = vmatpush1.bf16.msra.mxu0 0
  %196 = vmatprep.subr.bf16.mxu0 0
  %197 = vmatpush1.bf16.msra.mxu0 0
  %198 = vmatprep.subr.bf16.mxu0 0
  %199 = vmatpush1.bf16.msra.mxu0 0
  %200 = vmatprep.subr.bf16.mxu0 0
  %201 = vmatpush1.bf16.msra.mxu0 0
  %202 = vmatprep.subr.bf16.mxu0 0
  %203 = vmatpush1.bf16.msra.mxu0 0
  %204 = vmatprep.subr.bf16.mxu0 0
  %205 = vmatpush1.bf16.msra.mxu0 0
  %206 = vmatprep.subr.bf16.mxu0 0
  %207 = vmatpush1.bf16.msra.mxu0 0
  %208 = vmatprep.subr.bf16.mxu0 %v192
  %209 = vmatpush1.bf16.msra.mxu0 %v189
  %210 = vmatprep.subr.bf16.mxu0 0
  %211 = vmatpush2.bf16.msra.mxu0 0
  %212 = vmatprep.subr.bf16.mxu0 0
  %213 = vmatpush2.bf16.msra.mxu0 0
  %214 = vmatprep.subr.bf16.mxu0 0
  %215 = vmatpush2.bf16.msra.mxu0 0
  %216 = vmatprep.subr.bf16.mxu0 0
  %217 = vmatpush2.bf16.msra.mxu0 0
  %218 = vmatprep.subr.bf16.mxu0 0
  %219 = vmatpush2.bf16.msra.mxu0 0
  %220 = vmatprep.subr.bf16.mxu0 0
  %221 = vmatpush2.bf16.msra.mxu0 0
  %222 = vmatprep.subr.bf16.mxu0 0
  %223 = vmatpush2.bf16.msra.mxu0 0
  %224 = vmatprep.subr.bf16.mxu0 0
  %225 = vmatpush2.bf16.msra.mxu0 0
  %226 = vmatprep.mubr.bf16.mxu0 0
  %227 = vmatmul.mubr.bf16.gmra.mxu0 %v186
  %v228 = vpop.f32.mrf.mxu0
  %v229 = vadd.f32 %v132, %v228
  %v230 = vpop.f32.mrf.mxu0
  %v231 = vadd.f32 %v134, %v230
  %v232 = vpop.f32.mrf.mxu0
  %v233 = vpop.f32.mrf.mxu0
  %234 = vdwg.mxu0
  %v236 = vsel %vm90, %v66, 0
  %v239 = vsel %vm90, %v67, 0
  %241 = vmatprep.subr.bf16.mxu0 0
  %242 = vmatpush1.bf16.msra.mxu0 0
  %243 = vmatprep.subr.bf16.mxu0 0
  %244 = vmatpush1.bf16.msra.mxu0 0
  %245 = vmatprep.subr.bf16.mxu0 0
  %246 = vmatpush1.bf16.msra.mxu0 0
  %247 = vmatprep.subr.bf16.mxu0 0
  %248 = vmatpush1.bf16.msra.mxu0 0
  %249 = vmatprep.subr.bf16.mxu0 0
  %250 = vmatpush1.bf16.msra.mxu0 0
  %251 = vmatprep.subr.bf16.mxu0 0
  %252 = vmatpush1.bf16.msra.mxu0 0
  %253 = vmatprep.subr.bf16.mxu0 0
  %254 = vmatpush1.bf16.msra.mxu0 0
  %255 = vmatprep.subr.bf16.mxu0 %v239
  %256 = vmatpush1.bf16.msra.mxu0 %v236
  %257 = vmatprep.subr.bf16.mxu0 0
  %258 = vmatpush2.bf16.msra.mxu0 0
  %259 = vmatprep.subr.bf16.mxu0 0
  %260 = vmatpush2.bf16.msra.mxu0 0
  %261 = vmatprep.subr.bf16.mxu0 0
  %262 = vmatpush2.bf16.msra.mxu0 0
  %263 = vmatprep.subr.bf16.mxu0 0
  %264 = vmatpush2.bf16.msra.mxu0 0
  %265 = vmatprep.subr.bf16.mxu0 0
  %266 = vmatpush2.bf16.msra.mxu0 0
  %267 = vmatprep.subr.bf16.mxu0 0
  %268 = vmatpush2.bf16.msra.mxu0 0
  %269 = vmatprep.subr.bf16.mxu0 0
  %270 = vmatpush2.bf16.msra.mxu0 0
  %271 = vmatprep.subr.bf16.mxu0 0
  %272 = vmatpush2.bf16.msra.mxu0 0
  %273 = vmatprep.mubr.bf16.mxu0 0
  %274 = vmatmul.mubr.bf16.gmra.mxu0 %v186
  %v275 = vpop.f32.mrf.mxu0
  %v276 = vadd.f32 %v179, %v275
  %v277 = vpop.f32.mrf.mxu0
  %v278 = vadd.f32 %v181, %v277
  %v279 = vpop.f32.mrf.mxu0
  %v280 = vpop.f32.mrf.mxu0
  %281 = vdwg.mxu0
  %s282 = scalar_lea.vmem %s1, 8
  %v283 = vld [vmem:[%s282] sm:$0xf]
  %284 = vrot.lane.b32.xlu0 %v54, 127
  %v285 = vpop.permute.xlu0 %284
  %286 = vrot.lane.b32.xlu0 %v55, 127
  %v287 = vpop.permute.xlu0 %286
  %288 = vrot.lane.b32.xlu0 %v60, 127
  %v289 = vpop.permute.xlu0 %288
  %290 = vrot.lane.b32.xlu0 %v61, 127
  %v291 = vpop.permute.xlu0 %290
  %vm292 = vcmp.lt.s32.totalorder %v46, 127
  %v293 = vsel %vm292, %v285, %v289
  %v294 = vsel %vm292, %v287, %v291
  %v295 = vsel %vm292, %v289, %v285
  %v296 = vsel %vm292, %v291, %v287
  %v297 = vpack.c.bf16 %v293, %v293
  %v298 = vpack.c.bf16 %v295, %v295
  %v299 = vpack.c.bf16 %v294, %v294
  %v300 = vpack.c.bf16 %v296, %v296
  %v302 = vsel %vm86, %v283, 0
  %v305 = vsel %vm90, %v297, 0
  %v308 = vsel %vm90, %v298, 0
  %310 = vmatprep.subr.bf16.mxu0 0
  %311 = vmatpush1.bf16.msra.mxu0 0
  %312 = vmatprep.subr.bf16.mxu0 0
  %313 = vmatpush1.bf16.msra.mxu0 0
  %314 = vmatprep.subr.bf16.mxu0 0
  %315 = vmatpush1.bf16.msra.mxu0 0
  %316 = vmatprep.subr.bf16.mxu0 0
  %317 = vmatpush1.bf16.msra.mxu0 0
  %318 = vmatprep.subr.bf16.mxu0 0
  %319 = vmatpush1.bf16.msra.mxu0 0
  %320 = vmatprep.subr.bf16.mxu0 0
  %321 = vmatpush1.bf16.msra.mxu0 0
  %322 = vmatprep.subr.bf16.mxu0 0
  %323 = vmatpush1.bf16.msra.mxu0 0
  %324 = vmatprep.subr.bf16.mxu0 %v308
  %325 = vmatpush1.bf16.msra.mxu0 %v305
  %326 = vmatprep.subr.bf16.mxu0 0
  %327 = vmatpush2.bf16.msra.mxu0 0
  %328 = vmatprep.subr.bf16.mxu0 0
  %329 = vmatpush2.bf16.msra.mxu0 0
  %330 = vmatprep.subr.bf16.mxu0 0
  %331 = vmatpush2.bf16.msra.mxu0 0
  %332 = vmatprep.subr.bf16.mxu0 0
  %333 = vmatpush2.bf16.msra.mxu0 0
  %334 = vmatprep.subr.bf16.mxu0 0
  %335 = vmatpush2.bf16.msra.mxu0 0
  %336 = vmatprep.subr.bf16.mxu0 0
  %337 = vmatpush2.bf16.msra.mxu0 0
  %338 = vmatprep.subr.bf16.mxu0 0
  %339 = vmatpush2.bf16.msra.mxu0 0
  %340 = vmatprep.subr.bf16.mxu0 0
  %341 = vmatpush2.bf16.msra.mxu0 0
  %342 = vmatprep.mubr.bf16.mxu0 0
  %343 = vmatmul.mubr.bf16.gmra.mxu0 %v302
  %v344 = vpop.f32.mrf.mxu0
  %v345 = vadd.f32 0.0, %v344
  %v346 = vpop.f32.mrf.mxu0
  %v347 = vadd.f32 0.0, %v346
  %v348 = vpop.f32.mrf.mxu0
  %v349 = vpop.f32.mrf.mxu0
  %350 = vdwg.mxu0
  %v352 = vsel %vm90, %v299, 0
  %v355 = vsel %vm90, %v300, 0
  %357 = vmatprep.subr.bf16.mxu0 0
  %358 = vmatpush1.bf16.msra.mxu0 0
  %359 = vmatprep.subr.bf16.mxu0 0
  %360 = vmatpush1.bf16.msra.mxu0 0
  %361 = vmatprep.subr.bf16.mxu0 0
  %362 = vmatpush1.bf16.msra.mxu0 0
  %363 = vmatprep.subr.bf16.mxu0 0
  %364 = vmatpush1.bf16.msra.mxu0 0
  %365 = vmatprep.subr.bf16.mxu0 0
  %366 = vmatpush1.bf16.msra.mxu0 0
  %367 = vmatprep.subr.bf16.mxu0 0
  %368 = vmatpush1.bf16.msra.mxu0 0
  %369 = vmatprep.subr.bf16.mxu0 0
  %370 = vmatpush1.bf16.msra.mxu0 0
  %371 = vmatprep.subr.bf16.mxu0 %v355
  %372 = vmatpush1.bf16.msra.mxu0 %v352
  %373 = vmatprep.subr.bf16.mxu0 0
  %374 = vmatpush2.bf16.msra.mxu0 0
  %375 = vmatprep.subr.bf16.mxu0 0
  %376 = vmatpush2.bf16.msra.mxu0 0
  %377 = vmatprep.subr.bf16.mxu0 0
  %378 = vmatpush2.bf16.msra.mxu0 0
  %379 = vmatprep.subr.bf16.mxu0 0
  %380 = vmatpush2.bf16.msra.mxu0 0
  %381 = vmatprep.subr.bf16.mxu0 0
  %382 = vmatpush2.bf16.msra.mxu0 0
  %383 = vmatprep.subr.bf16.mxu0 0
  %384 = vmatpush2.bf16.msra.mxu0 0
  %385 = vmatprep.subr.bf16.mxu0 0
  %386 = vmatpush2.bf16.msra.mxu0 0
  %387 = vmatprep.subr.bf16.mxu0 0
  %388 = vmatpush2.bf16.msra.mxu0 0
  %389 = vmatprep.mubr.bf16.mxu0 0
  %390 = vmatmul.mubr.bf16.gmra.mxu0 %v302
  %v391 = vpop.f32.mrf.mxu0
  %v392 = vadd.f32 0.0, %v391
  %v393 = vpop.f32.mrf.mxu0
  %v394 = vadd.f32 0.0, %v393
  %v395 = vpop.f32.mrf.mxu0
  %v396 = vpop.f32.mrf.mxu0
  %397 = vdwg.mxu0
  %v398 = vadd.f32 %v229, %v345
  %v399 = vadd.f32 %v231, %v347
  %v400 = vadd.f32 %v276, %v392
  %v401 = vadd.f32 %v278, %v394
  %v402 = vld [vmem:[%s2] sm:$0xff]
  %404 = vset.pattern.permute.xlu0 0
  %405 = vperm.xlu0 %404, %v402
  %v406 = vpop.permute.xlu0 %405
  %v408 = vadd.f32 %v398, %v406
  %v409 = vadd.f32 %v399, %v406
  %v410 = vadd.f32 %v400, %v406
  %v411 = vadd.f32 %v401, %v406
  %v412 = vmul.f32 %v408, 0.5
  %v413 = vmul.f32 %v409, 0.5
  %v414 = vmul.f32 %v410, 0.5
  %v415 = vmul.f32 %v411, 0.5
  %v416 = vtanh.pop %v412
  %v417 = vtanh.pop %v413
  %v418 = vtanh.pop %v414
  %v419 = vtanh.pop %v415
  %v420 = vmul.f32 %v416, 0.5
  %v421 = vmul.f32 %v417, 0.5
  %v422 = vmul.f32 %v418, 0.5
  %v423 = vmul.f32 %v419, 0.5
  %v424 = vadd.f32 %v420, 0.5
  %v425 = vadd.f32 %v421, 0.5
  %v426 = vadd.f32 %v422, 0.5
  %v427 = vadd.f32 %v423, 0.5
  %v428 = vmul.f32 %v408, %v424
  %v429 = vmul.f32 %v409, %v425
  %v430 = vmul.f32 %v410, %v426
  %v431 = vmul.f32 %v411, %v427
  %v432 = vmul.f32 %v428, %v52
  %v433 = vmul.f32 %v429, %v53
  %v434 = vmul.f32 %v430, %v52
  %v435 = vmul.f32 %v431, %v53
  %v436 = vadd.f32 %v432, %v433
  %437 = vadd.xlane.f32.xlu0 %v436
  %v438 = vpop.xlane.xlu0 %437
  %v439 = vadd.f32 %v434, %v435
  %440 = vadd.xlane.f32.xlu0 %v439
  %v441 = vpop.xlane.xlu0 %440
  %v442 = vadd.f32 %v438, %v441
  %v443 = vmul.f32 %v442, 0.03125
  %v444 = vsub.f32 %v432, %v443
  %v445 = vsub.f32 %v433, %v443
  %v446 = vsub.f32 %v434, %v443
  %v447 = vsub.f32 %v435, %v443
  %v448 = vmul.f32 %v444, %v52
  %v449 = vmul.f32 %v445, %v53
  %v450 = vmul.f32 %v446, %v52
  %v451 = vmul.f32 %v447, %v53
  %v452 = vmul.f32 %v448, %v448
  %v453 = vmul.f32 %v449, %v449
  %v454 = vmul.f32 %v450, %v450
  %v455 = vmul.f32 %v451, %v451
  %v456 = vadd.f32 %v452, %v453
  %457 = vadd.xlane.f32.xlu0 %v456
  %v458 = vpop.xlane.xlu0 %457
  %v459 = vadd.f32 %v454, %v455
  %460 = vadd.xlane.f32.xlu0 %v459
  %v461 = vpop.xlane.xlu0 %460
  %v462 = vadd.f32 %v458, %v461
  %vm463 = vcmask 7168
  %464 = vst.msk [vmem:[%s13] sm:$0xff] %vm463, %v442
  %vm465 = vcmask 15368
  %466 = vst.msk [vmem:[%s13] sm:$0xff] %vm465, %v462
  // Predicated region
  $region54: #{tpu_custom_call.1} parent=0 // pred_check
    _
  $region55: #{tpu_custom_call.1} parent=0 // pred_check_branch
    %468 = sbr.rel (0) target = $region57
  $region56: #{tpu_custom_call.1} parent=0 // pred_region
    _
  $region57: #{tpu_custom_call.1} parent=0 // pred_fallthru
    _
  // Predicated region
  $region58: #{tpu_custom_call.1} parent=0 // pred_check
    _
  $region59: #{tpu_custom_call.1} parent=0 // pred_check_branch
    %470 = sbr.rel (0) target = $region61
  $region60: #{tpu_custom_call.1} parent=0 // pred_region
    _
  $region61: #{tpu_custom_call.1} parent=0 // pred_fallthru
    _

</llo_original>
